<compile_context>
chip_gen: v6e
topology: v6e:2x2x1
jax: 0.10.0
libtpu: 0.0.40
codegen_flags: <defaults>
</compile_context>

<pallas_src>
import functools

import jax
import jax.numpy as jnp
from jax.experimental import pallas as pl
from jax.experimental.pallas import tpu as pltpu

LANES = 128
SUBLANES = 8
ROW_MULT = 16          # row counts kept multiples of 16 (safe for bf16 sublane packing)
MAX_ROW_TILE = 2048    # (2048, 128) f32 block = 1 MiB; 2 inputs x 2 buffers = 4 MiB VMEM
NUM_SPLITS = 2         # leading "parallel" grid axis (v7x has 2 TensorCores)


def _mse_partial_kernel(p_ref, t_ref, out_ref, *, rows_valid, row_tile, steps_per_split):
    c = pl.program_id(0)   # parallel split (one per TensorCore on v7x)
    i = pl.program_id(1)   # reduction step within the split

    @pl.when(i == 0)
    def _():
        out_ref[...] = jnp.zeros_like(out_ref)

    # Cast in-kernel; inputs stay in their original HBM dtype.
    d = p_ref[...].astype(jnp.float32) - t_ref[...].astype(jnp.float32)
    sq = d * d

    # Mask rows past the end of the (lane-padded) array: handles the partial
    # edge block and fully zeroes "phantom" blocks of the parallel split.
    start_row = (c * steps_per_split + i) * row_tile
    row_ids = jax.lax.broadcasted_iota(jnp.int32, (row_tile, LANES), 0)
    sq = jnp.where(start_row + row_ids < rows_valid, sq, 0.0)

    # (row_tile, 128) -> (8, 128) via pure vreg adds (no cross-lane reduction),
    # accumulated into the VMEM-resident output block.
    out_ref[...] += jnp.sum(sq.reshape(-1, SUBLANES, LANES), axis=0)


def custom_loss(predictions, targets):
    """MSE loss: mean((predictions - targets)**2), computed in a Pallas kernel."""
    assert predictions.shape == targets.shape
    n_elems = predictions.size

    p = predictions.reshape(-1)
    t = targets.reshape(-1)

    # Tiny lane-alignment pad (only when n is not a multiple of 16*128) so the
    # flat array reshapes to (rows, 128) with rows a multiple of 16. The padded
    # zeros contribute 0 to the sum; the true ragged tail is masked in-kernel.
    chunk = ROW_MULT * LANES
    rem = n_elems % chunk
    if rem:
        pad = chunk - rem
        p = jnp.pad(p, (0, pad))
        t = jnp.pad(t, (0, pad))

    rows = p.size // LANES
    p2 = p.reshape(rows, LANES)
    t2 = t.reshape(rows, LANES)

    row_tile = min(MAX_ROW_TILE, rows)
    num_blocks = pl.cdiv(rows, row_tile)
    num_splits = min(NUM_SPLITS, num_blocks)
    steps_per_split = pl.cdiv(num_blocks, num_splits)
    last_block = num_blocks - 1

    def in_index_map(c, i):
        # Clamp so phantom tail blocks of the parallel split never DMA out of
        # bounds; their contribution is zeroed by the in-kernel row mask.
        return (jnp.minimum(c * steps_per_split + i, last_block), 0)

    kernel = functools.partial(
        _mse_partial_kernel,
        rows_valid=rows,
        row_tile=row_tile,
        steps_per_split=steps_per_split,
    )

    itemsize = jnp.dtype(predictions.dtype).itemsize
    cost = pl.CostEstimate(
        flops=3 * n_elems,
        bytes_accessed=2 * n_elems * itemsize,
        transcendentals=0,
    )

    partials = pl.pallas_call(
        kernel,
        out_shape=jax.ShapeDtypeStruct((num_splits * SUBLANES, LANES), jnp.float32),
        grid_spec=pltpu.PrefetchScalarGridSpec(
            num_scalar_prefetch=0,
            grid=(num_splits, steps_per_split),
            in_specs=[
                pl.BlockSpec((row_tile, LANES), in_index_map),
                pl.BlockSpec((row_tile, LANES), in_index_map),
            ],
            # One resident (8, 128) accumulator block per split; same block
            # across the reduction axis -> written back to HBM once per split.
            out_specs=pl.BlockSpec((SUBLANES, LANES), lambda c, i: (c, 0)),
        ),
        compiler_params=pltpu.CompilerParams(
            dimension_semantics=("parallel", "arbitrary"),
        ),
        cost_estimate=cost,
    )(p2, t2)

    # Final tiny cross-lane reduction + mean scaling (divide by TRUE count).
    return jnp.sum(partials) / n_elems


if __name__ == "__main__":
    key = jax.random.PRNGKey(0)
    k1, k2 = jax.random.split(key)
    shape = (2, 4, 16, 16)  # (B, C, H, W), NCHW like the PyTorch module
    predictions = jax.random.normal(k1, shape, dtype=jnp.float32)
    targets = jax.random.normal(k2, shape, dtype=jnp.float32)

    loss = custom_loss(predictions, targets)
    jax.block_until_ready(loss)

    # Cross-check against plain JAX reference.
    ref = jnp.mean((predictions - targets) ** 2)
    assert jnp.allclose(loss, ref, rtol=1e-5, atol=1e-6), (loss, ref)

    print("KERNEL_OK")
</pallas_src>

<mosaic_0001>
module attributes {stable_mosaic.version = 11 : i64} {
  func.func @_mse_partial_kernel(%arg0: i32, %arg1: i32, %arg2: memref<16x128xf32, #tpu.memory_space<vmem>>, %arg3: memref<16x128xf32, #tpu.memory_space<vmem>>, %arg4: memref<8x128xf32, #tpu.memory_space<vmem>>) attributes {dimension_semantics = [#tpu.dimension_semantics<parallel>, #tpu.dimension_semantics<arbitrary>], iteration_bounds = array<i64: 1, 1>, scalar_prefetch = 0 : i64, scratch_operands = 0 : i64, tpu.core_type = #tpu.core_type<tc>, window_params = [{transform_indices = @transform_0, window_bounds = array<i64: 16, 128>}, {transform_indices = @transform_1, window_bounds = array<i64: 16, 128>}, {transform_indices = @transform_2, window_bounds = array<i64: 8, 128>}]} {
    %c0_i32 = arith.constant 0 : i32
    %0 = arith.cmpi eq, %arg1, %c0_i32 : i32
    %1 = arith.extui %0 : i1 to i32
    %c0_i32_0 = arith.constant 0 : i32
    %2 = arith.cmpi ne, %1, %c0_i32_0 : i32
    scf.if %2 {
      %cst_10 = arith.constant 0.000000e+00 : f32
      %22 = vector.broadcast %cst_10 : f32 to vector<8x128xf32>
      %c0_11 = arith.constant 0 : index
      %c0_12 = arith.constant 0 : index
      %23 = vector.load %arg4[%c0_11, %c0_12] : memref<8x128xf32, #tpu.memory_space<vmem>>, vector<8x128xf32>
      tpu.vector_store %arg4[%c0_11, %c0_12], %22 {strides = array<i32>} : memref<8x128xf32, #tpu.memory_space<vmem>>, vector<8x128xf32>,
    } else {
    }
    %c0 = arith.constant 0 : index
    %c0_1 = arith.constant 0 : index
    %3 = vector.load %arg2[%c0, %c0_1] : memref<16x128xf32, #tpu.memory_space<vmem>>, vector<16x128xf32>
    %c0_2 = arith.constant 0 : index
    %c0_3 = arith.constant 0 : index
    %4 = vector.load %arg3[%c0_2, %c0_3] : memref<16x128xf32, #tpu.memory_space<vmem>>, vector<16x128xf32>
    %5 = arith.subf %3, %4 : vector<16x128xf32>
    %6 = arith.mulf %5, %5 : vector<16x128xf32>
    %c1_i32 = arith.constant 1 : i32
    %7 = arith.muli %arg0, %c1_i32 : i32
    %8 = arith.addi %7, %arg1 : i32
    %c16_i32 = arith.constant 16 : i32
    %9 = arith.muli %8, %c16_i32 : i32
    %10 = tpu.iota {dimensions = array<i32: 0>} : vector<16x128xi32>
    %11 = vector.broadcast %9 : i32 to vector<16x128xi32>
    %12 = arith.addi %11, %10 : vector<16x128xi32>
    %c16_i32_4 = arith.constant 16 : i32
    %13 = vector.broadcast %c16_i32_4 : i32 to vector<16x128xi32>
    %14 = arith.cmpi slt, %12, %13 : vector<16x128xi32>
    %cst = arith.constant 0.000000e+00 : f32
    %15 = vector.broadcast %cst : f32 to vector<16x128xf32>
    %16 = arith.select %14, %6, %15 : vector<16x128xi1>, vector<16x128xf32>
    %c0_5 = arith.constant 0 : index
    %c0_6 = arith.constant 0 : index
    %17 = vector.load %arg4[%c0_5, %c0_6] : memref<8x128xf32, #tpu.memory_space<vmem>>, vector<8x128xf32>
    %18 = vector.shape_cast %16 : vector<16x128xf32> to vector<2x8x128xf32>
    %cst_7 = arith.constant dense<0.000000e+00> : vector<8x128xf32>
    %19 = vector.multi_reduction <add>, %18, %cst_7 [0] : vector<2x8x128xf32> to vector<8x128xf32>
    %20 = arith.addf %17, %19 : vector<8x128xf32>
    %c0_8 = arith.constant 0 : index
    %c0_9 = arith.constant 0 : index
    %21 = vector.load %arg4[%c0_8, %c0_9] : memref<8x128xf32, #tpu.memory_space<vmem>>, vector<8x128xf32>
    tpu.vector_store %arg4[%c0_8, %c0_9], %20 {strides = array<i32>} : memref<8x128xf32, #tpu.memory_space<vmem>>, vector<8x128xf32>,
    return
  }
  func.func @transform_0(%arg0: i32, %arg1: i32) -> (i32, i32) {
    %c1_i32 = arith.constant 1 : i32
    %0 = arith.muli %arg0, %c1_i32 : i32
    %1 = arith.addi %0, %arg1 : i32
    %c0_i32 = arith.constant 0 : i32
    %2 = arith.minsi %1, %c0_i32 : i32
    %c0_i32_0 = arith.constant 0 : i32
    %c0_i32_1 = arith.constant 0 : i32
    return %2, %c0_i32_0 : i32, i32
  }
  func.func @transform_1(%arg0: i32, %arg1: i32) -> (i32, i32) {
    %c1_i32 = arith.constant 1 : i32
    %0 = arith.muli %arg0, %c1_i32 : i32
    %1 = arith.addi %0, %arg1 : i32
    %c0_i32 = arith.constant 0 : i32
    %2 = arith.minsi %1, %c0_i32 : i32
    %c0_i32_0 = arith.constant 0 : i32
    %c0_i32_1 = arith.constant 0 : i32
    return %2, %c0_i32_0 : i32, i32
  }
  func.func @transform_2(%arg0: i32, %arg1: i32) -> (i32, i32) {
    %c0_i32 = arith.constant 0 : i32
    %c0_i32_0 = arith.constant 0 : i32
    return %arg0, %c0_i32 : i32, i32
  }
}

</mosaic_0001>

<llo_original>
// kernel: tpu_custom_call.1
$region0: #{tpu_custom_call.1}
  #allocation0 [shape = 'u32[]', space=smem, size = 0x4, offset = 0x4, fixed_abs, tag = 'smem constant byte address 0x4 - core index']
  #allocation1 [shape = 'u32[144,128]{1,0:T(1,128)}', space=vmem, size = 0x12000, scoped, tag = 'internal scratch']
  %s0 = inlined_call_operand.hbm [shape: f32[16,128], index: 0, kind: input, shape index: {}]
  %s1 = inlined_call_operand.hbm [shape: f32[16,128], index: 1, kind: input, shape index: {}]
  %s2 = inlined_call_operand.hbm [shape: f32[8,128], index: 2, kind: output, shape index: {}]
  %s3 = sld [smem:[#allocation0]]
  $region30: #{tpu_custom_call.1} parent=0
    _
  %s5 = ssub.s32 1, %s3
  %s6 = scalar_select 0, %s5, %s3
  $region1: #{tpu_custom_call.1} parent=0
    #allocation2 [shape = 'u8[8192]{0}', space=vmem, size = 0x2000, scoped, tag = 'input window, operand 0, single buffered']
    #allocation3 [shape = 's32[1]{0}', space=sflag, size = 0x4, scoped, tag = 'scoped memory for tpu_custom_call.1']
    #allocation4 [shape = 's32[1]{0}', space=sflag, size = 0x4, scoped, tag = 'scoped memory for tpu_custom_call.1']
    #allocation5 [shape = 'u8[8192]{0}', space=vmem, size = 0x2000, scoped, tag = 'input window, operand 1, single buffered']
    #allocation6 [shape = 's32[1]{0}', space=sflag, size = 0x4, scoped, tag = 'scoped memory for tpu_custom_call.1']
    #allocation7 [shape = 'u8[4096]{0}', space=vmem, size = 0x1000, scoped, tag = 'output window, operand 0, single buffered']
    %7 = vsyncpa [#allocation3], 0
    %8 = vsyncpa [#allocation6], 0
    %9 = vsyncpa [#allocation4], 0
    // Predicated region
    $region2: #{tpu_custom_call.1} parent=1 // pred_check
      _
    $region3: #{tpu_custom_call.1} parent=1 // pred_check_branch
      %11 = sbr.rel (0) target = $region5
    $region4: #{tpu_custom_call.1} parent=1 // pred_region
      %s12 = sadd.s32 0, 0
      %p13 = scmp.lt.s32.totalorder %s12, 0
      %s14 = scalar_select %p13, %s12, 0
      %s15 = smul.u32 2, %s14
      %s17 = ssub.s32 256, 256
      %18 = vsyncadd [#allocation3], %s17
      %s19 = smul.addr %s15, 128
      %s20 = scalar_lea.hbm %s0, %s19
      %s21 = sshll.u32 [#allocation2], 4
      %s22 = int_to_ptr.vmem [resolvable:$true] %s21
      %27 = dma.hbm_to_vmem [thread:$0]  %s20, 256, %s22, [#allocation3], 128, 128, 8
    $region5: #{tpu_custom_call.1} parent=1 // pred_fallthru
      _
    // Predicated region
    $region6: #{tpu_custom_call.1} parent=1 // pred_check
      _
    $region7: #{tpu_custom_call.1} parent=1 // pred_check_branch
      %29 = sbr.rel (0) target = $region9
    $region8: #{tpu_custom_call.1} parent=1 // pred_region
      %s30 = sadd.s32 0, 0
      %p31 = scmp.lt.s32.totalorder %s30, 0
      %s32 = scalar_select %p31, %s30, 0
      %s33 = smul.u32 2, %s32
      %s35 = ssub.s32 256, 256
      %36 = vsyncadd [#allocation6], %s35
      %s37 = smul.addr %s33, 128
      %s38 = scalar_lea.hbm %s1, %s37
      %s39 = sshll.u32 [#allocation5], 4
      %s40 = int_to_ptr.vmem [resolvable:$true] %s39
      %45 = dma.hbm_to_vmem [thread:$0]  %s38, 256, %s40, [#allocation6], 128, 128, 8
    $region9: #{tpu_custom_call.1} parent=1 // pred_fallthru
      _
    // Predicated region
    $region10: #{tpu_custom_call.1} parent=1 // pred_check
      _
    $region11: #{tpu_custom_call.1} parent=1 // pred_check_branch
      %47 = sbr.rel (0) target = $region13
    $region12: #{tpu_custom_call.1} parent=1 // pred_region
      %48 = dma.done [#allocation3], 256
    $region13: #{tpu_custom_call.1} parent=1 // pred_fallthru
      _
    // Predicated region
    $region14: #{tpu_custom_call.1} parent=1 // pred_check
      _
    $region15: #{tpu_custom_call.1} parent=1 // pred_check_branch
      %50 = sbr.rel (0) target = $region17
    $region16: #{tpu_custom_call.1} parent=1 // pred_region
      %51 = dma.done [#allocation6], 256
    $region17: #{tpu_custom_call.1} parent=1 // pred_fallthru
      _
    %s52 = sadd.s32 0, 0
    %p53 = scmp.lt.s32.totalorder %s52, 0
    %s54 = scalar_select %p53, %s52, 0
    %s55 = smul.u32 2, %s54
    %s56 = sadd.s32 0, 0
    %p57 = scmp.lt.s32.totalorder %s56, 0
    %s58 = scalar_select %p57, %s56, 0
    %s59 = smul.u32 2, %s58
    %p60 = scmp.eq.s32.totalorder 0, 0
    // Predicated region
    $region18: #{tpu_custom_call.1} parent=1 // pred_check
      %p61 = pneg %p60
    $region19: #{tpu_custom_call.1} parent=1 // pred_check_branch
      %63 = sbr.rel (%p61) target = $region21
    $region20: #{tpu_custom_call.1} parent=1 // pred_region
      %64 = vst [vmem:[#allocation7] sm:$0xff] 0.0
    $region21: #{tpu_custom_call.1} parent=1 // pred_fallthru
      _
    %v65 = vld [vmem:[#allocation2] sm:$0xff]
    %v66 = vld [vmem:[#allocation2 + $0x8] sm:$0xff]
    %v67 = vld [vmem:[#allocation5] sm:$0xff]
    %v68 = vld [vmem:[#allocation5 + $0x8] sm:$0xff]
    %v69 = vsub.f32 %v65, %v67
    %v70 = vsub.f32 %v66, %v68
    %v71 = vmul.f32 %v69, %v69
    %v72 = vmul.f32 %v70, %v70
    %s73 = sadd.s32 0, 0
    %s74 = smul.u32 %s73, 16
    %v75 = vlaneseq
    %v76 = vshrl.u32 %v75, 7
    %v77 = vadd.s32 %v76, 8
    %v78 = vstv %s74
    %v79 = vadd.s32 %v78, %v76
    %v80 = vadd.s32 %v78, %v77
    %vm81 = vcmp.lt.s32.totalorder %v79, 16
    %vm82 = vcmp.lt.s32.totalorder %v80, 16
    %v83 = vsel %vm81, %v71, 0.0
    %v84 = vsel %vm82, %v72, 0.0
    %v85 = vld [vmem:[#allocation7] sm:$0xff]
    %v86 = vadd.f32 %v83, %v84
    %v87 = vadd.f32 %v85, %v86
    %88 = vst [vmem:[#allocation7] sm:$0xff] %v87
    // Predicated region
    $region22: #{tpu_custom_call.1} parent=1 // pred_check
      _
    $region23: #{tpu_custom_call.1} parent=1 // pred_check_branch
      %90 = sbr.rel (0) target = $region25
    $region24: #{tpu_custom_call.1} parent=1 // pred_region
      %s92 = ssub.s32 128, 128
      %93 = vsyncadd [#allocation4], %s92
      %s95 = sshll.u32 [#allocation7], 4
      %s96 = int_to_ptr.vmem [resolvable:$true] %s95
      %98 = dma.vmem_to_hbm [thread:$0]  %s96, 128, %s2, [#allocation4]
    $region25: #{tpu_custom_call.1} parent=1 // pred_fallthru
      _
    // Predicated region
    $region26: #{tpu_custom_call.1} parent=1 // pred_check
      _
    $region27: #{tpu_custom_call.1} parent=1 // pred_check_branch
      %100 = sbr.rel (0) target = $region29
    $region28: #{tpu_custom_call.1} parent=1 // pred_region
      %101 = dma.done [#allocation4], 128
    $region29: #{tpu_custom_call.1} parent=1 // pred_fallthru
      _
    %102 = vsyncpa [#allocation3], 1
    %103 = vsyncpa [#allocation6], 1
    %104 = vsyncpa [#allocation4], 1

</llo_original>
